<compile_context>
chip_gen: v6e
topology: v6e:2x2x1
jax: 0.10.0
libtpu: 0.0.40
codegen_flags: <defaults>
</compile_context>

<pallas_src>
import jax
import jax.numpy as jnp
from jax.experimental import pallas as pl
from jax.experimental.pallas import tpu as pltpu


def _make_outconv_kernel(c_in, c_out):
    def kernel(x_ref, w_ref, b_ref, o_ref):
        # x_ref: (1, c_in, T) VMEM   w_ref: (c_in, c_out) VMEM f32
        # b_ref: (c_out,)     SMEM   o_ref: (1, c_out, T) VMEM
        x = x_ref[0].astype(jnp.float32)                      # (c_in, T)
        rows = []
        for co in range(c_out):
            w_col = w_ref[:, co:co + 1]                       # (c_in, 1) f32
            acc = jnp.sum(x * w_col, axis=0, keepdims=True)   # (1, T) f32 (XLU reduce)
            rows.append(acc + b_ref[co])                      # bias from SMEM scalar
        out = rows[0] if c_out == 1 else jnp.concatenate(rows, axis=0)
        o_ref[0] = out.astype(o_ref.dtype)                    # lane-dense store
    return kernel


def _pick_tile_hw(hw, c_in, c_out, max_tile_hw=None):
    """Tile of the flattened spatial axis (lane axis)."""
    if max_tile_hw is None:
        # ~8 MiB for double-buffered input + output tiles (safe on v7x 32 MiB scoped).
        budget = 8 * 1024 * 1024
        t = budget // (2 * 4 * (c_in + c_out))
        t = max(512, (t // 128) * 128)
        t = min(t, 65536)
    else:
        t = max(128, (max_tile_hw // 128) * 128)
    if hw <= t:
        return hw            # full extent: always a legal block shape
    return t                 # multiple of 128; ragged last block is masked by Pallas


def outconv_pallas(x_nchw, weight, bias, *, max_tile_hw=None):
    """1x1 Conv2d forward (PyTorch nn.Conv2d(C_in, C_out, kernel_size=1)).

    x_nchw: (N, C_in, H, W)
    weight: (C_out, C_in, 1, 1)
    bias:   (C_out,)
    returns (N, C_out, H, W), same dtype as input.
    """
    N, C_in, H, W = x_nchw.shape
    C_out = weight.shape[0]
    HW = H * W

    x3 = x_nchw.reshape(N, C_in, HW)                          # contiguous -> free
    w_mat = weight.reshape(C_out, C_in).T.astype(jnp.float32)  # (C_in, C_out), tiny
    b_vec = bias.astype(jnp.float32)                           # (C_out,)

    tile_hw = _pick_tile_hw(HW, C_in, C_out, max_tile_hw)
    n_hw = pl.cdiv(HW, tile_hw)

    itemsize = int(jnp.dtype(x_nchw.dtype).itemsize)
    cost = pl.CostEstimate(
        flops=2 * N * HW * C_in * C_out,
        transcendentals=0,
        bytes_accessed=N * HW * (C_in + C_out) * itemsize
        + int(w_mat.size) * 4 + int(b_vec.size) * 4,
    )

    out3 = pl.pallas_call(
        _make_outconv_kernel(C_in, C_out),
        out_shape=jax.ShapeDtypeStruct((N, C_out, HW), x_nchw.dtype),
        grid=(N, n_hw),
        in_specs=[
            pl.BlockSpec((1, C_in, tile_hw), lambda n, s: (n, 0, s)),
            pl.BlockSpec((C_in, C_out), lambda n, s: (0, 0)),
            pl.BlockSpec(memory_space=pltpu.MemorySpace.SMEM),
        ],
        out_specs=pl.BlockSpec((1, C_out, tile_hw), lambda n, s: (n, 0, s)),
        compiler_params=pltpu.CompilerParams(
            dimension_semantics=("parallel", "parallel"),
            vmem_limit_bytes=32 * 1024 * 1024,
        ),
        cost_estimate=cost,
    )(x3, w_mat, b_vec)

    return out3.reshape(N, C_out, H, W)


def _reference(x, weight, bias):
    """Plain-JAX 1x1 conv reference (elementwise f32, no MXU rounding)."""
    C_out, C_in = weight.shape[:2]
    w = weight.reshape(1, C_out, C_in, 1, 1)
    return (x[:, None] * w).sum(axis=2) + bias.reshape(1, C_out, 1, 1)


if __name__ == "__main__":
    key = jax.random.PRNGKey(0)

    def run_case(k, N, C_in, C_out, H, W, max_tile_hw=None):
        kx, kw, kb = jax.random.split(k, 3)
        x = jax.random.normal(kx, (N, C_in, H, W), dtype=jnp.float32)
        bound = 1.0 / (C_in ** 0.5)
        weight = jax.random.uniform(kw, (C_out, C_in, 1, 1), jnp.float32,
                                    minval=-bound, maxval=bound)
        bias = jax.random.uniform(kb, (C_out,), jnp.float32,
                                  minval=-bound, maxval=bound)
        out = jax.block_until_ready(
            outconv_pallas(x, weight, bias, max_tile_hw=max_tile_hw))
        ref = _reference(x, weight, bias)
        assert out.shape == (N, C_out, H, W)
        assert jnp.allclose(out, ref, atol=1e-4, rtol=1e-4), \
            f"mismatch for shape {(N, C_in, C_out, H, W)}"

    k1, k2 = jax.random.split(key)
    # MSPSNet's actual output head: OutConv(64, 1) on a small feature map.
    run_case(k1, N=2, C_in=64, C_out=1, H=16, W=16)
    # Exercise multi-output-channel path and a multi-tile spatial grid.
    run_case(k2, N=2, C_in=4, C_out=3, H=16, W=16, max_tile_hw=128)

    print("KERNEL_OK")
</pallas_src>

<mosaic_0001>
module attributes {stable_mosaic.version = 11 : i64} {
  func.func @kernel(%arg0: i32, %arg1: i32, %arg2: memref<1x64x256xf32, #tpu.memory_space<vmem>>, %arg3: memref<64x1xf32, #tpu.memory_space<vmem>>, %arg4: memref<1xf32, #tpu.memory_space<smem>>, %arg5: memref<1x1x256xf32, #tpu.memory_space<vmem>>) attributes {dimension_semantics = [#tpu.dimension_semantics<parallel>, #tpu.dimension_semantics<parallel>], iteration_bounds = array<i64: 2, 1>, scalar_prefetch = 0 : i64, scratch_operands = 0 : i64, tpu.core_type = #tpu.core_type<tc>, window_params = [{transform_indices = @transform_0, window_bounds = array<i64: 1, 64, 256>}, {pipeline_mode = #tpu.pipeline_mode<synchronous>, transform_indices = @transform_1, window_bounds = array<i64: 64, 1>}, {transform_indices = @transform_2, window_bounds = array<i64: 1>}, {transform_indices = @transform_3, window_bounds = array<i64: 1, 1, 256>}]} {
    %c0 = arith.constant 0 : index
    %c0_0 = arith.constant 0 : index
    %c0_1 = arith.constant 0 : index
    %0 = vector.load %arg2[%c0, %c0_0, %c0_1] : memref<1x64x256xf32, #tpu.memory_space<vmem>>, vector<1x64x256xf32>
    %1 = vector.shape_cast %0 : vector<1x64x256xf32> to vector<64x256xf32>
    %c0_2 = arith.constant 0 : index
    %c0_3 = arith.constant 0 : index
    %2 = vector.load %arg3[%c0_2, %c0_3] : memref<64x1xf32, #tpu.memory_space<vmem>>, vector<64x1xf32>
    %3 = vector.broadcast %2 : vector<64x1xf32> to vector<64x256xf32>
    %4 = arith.mulf %1, %3 : vector<64x256xf32>
    %cst = arith.constant dense<0.000000e+00> : vector<256xf32>
    %5 = vector.multi_reduction <add>, %4, %cst [0] : vector<64x256xf32> to vector<256xf32>
    %6 = vector.shape_cast %5 : vector<256xf32> to vector<1x256xf32>
    %c0_4 = arith.constant 0 : index
    %7 = memref.load %arg4[%c0_4] : memref<1xf32, #tpu.memory_space<smem>>
    %8 = vector.broadcast %7 : f32 to vector<1x256xf32>
    %9 = arith.addf %6, %8 : vector<1x256xf32>
    %c0_5 = arith.constant 0 : index
    %c0_6 = arith.constant 0 : index
    %c0_7 = arith.constant 0 : index
    %10 = vector.load %arg5[%c0_5, %c0_6, %c0_7] : memref<1x1x256xf32, #tpu.memory_space<vmem>>, vector<1x1x256xf32>
    %11 = vector.shape_cast %10 : vector<1x1x256xf32> to vector<1x256xf32>
    %12 = vector.shape_cast %9 : vector<1x256xf32> to vector<1x1x256xf32>
    tpu.vector_store %arg5[%c0_5, %c0_6, %c0_7], %12 {strides = array<i32>} : memref<1x1x256xf32, #tpu.memory_space<vmem>>, vector<1x1x256xf32>,
    return
  }
  func.func @transform_0(%arg0: i32, %arg1: i32) -> (i32, i32, i32) {
    %c0_i32 = arith.constant 0 : i32
    %c0_i32_0 = arith.constant 0 : i32
    return %arg0, %c0_i32, %arg1 : i32, i32, i32
  }
  func.func @transform_1(%arg0: i32, %arg1: i32) -> (i32, i32) {
    %c0_i32 = arith.constant 0 : i32
    %c0_i32_0 = arith.constant 0 : i32
    %c0_i32_1 = arith.constant 0 : i32
    return %c0_i32, %c0_i32_0 : i32, i32
  }
  func.func @transform_2(%arg0: i32, %arg1: i32) -> i32 {
    %c0_i32 = arith.constant 0 : i32
    %c0_i32_0 = arith.constant 0 : i32
    return %c0_i32 : i32
  }
  func.func @transform_3(%arg0: i32, %arg1: i32) -> (i32, i32, i32) {
    %c0_i32 = arith.constant 0 : i32
    %c0_i32_0 = arith.constant 0 : i32
    return %arg0, %c0_i32, %arg1 : i32, i32, i32
  }
}

</mosaic_0001>

<llo_original>
// kernel: tpu_custom_call.1
$region0: #{tpu_custom_call.1}
  #allocation0 [shape = 'u32[]', space=smem, size = 0x4, offset = 0x4, fixed_abs, tag = 'smem constant byte address 0x4 - core index']
  #allocation1 [shape = 'u32[144,128]{1,0:T(1,128)}', space=vmem, size = 0x12000, scoped, tag = 'internal scratch']
  #allocation2 [shape = 'f32[1]{0:T(128)S(6)}', space=smem, size = 0x200, scoped, tag = 'scoped memory for tpu_custom_call.1']
  %s0 = inlined_call_operand.hbm [shape: f32[2,64,256], index: 0, kind: input, shape index: {}]
  %s1 = inlined_call_operand.vmem [shape: f32[64,1], index: 1, kind: input, shape index: {}]
  %s2 = inlined_call_operand.<no memory space> [shape: f32[1], index: 2, kind: input, shape index: {}]
  %s3 = inlined_call_operand.hbm [shape: f32[2,1,256], index: 3, kind: output, shape index: {}]
  %s4 = sld [smem:[#allocation0]]
  $region49: #{tpu_custom_call.1} parent=0
    _
  %s6 = ssub.s32 1, %s4
  %s7 = scalar_select 0, %s6, %s4
  %8 = sst [smem:[#allocation2]] %s2
  $region1: #{tpu_custom_call.1} parent=0
    #allocation3 [shape = 'u8[131072]{0}', space=vmem, size = 0x20000, scoped, tag = 'input window, operand 0']
    #allocation4 [shape = 's32[2]{0}', space=sflag, size = 0x8, scoped, tag = 'scoped memory for tpu_custom_call.1']
    #allocation5 [shape = 's32[2]{0}', space=sflag, size = 0x8, scoped, tag = 'scoped memory for tpu_custom_call.1']
    #allocation6 [shape = 'u8[2048]{0}', space=vmem, size = 0x800, scoped, tag = 'output window, operand 0']
    %9 = vsyncpa [#allocation4], 0
    %s10 = scalar_lea.sflag [#allocation4], 1
    %11 = vsyncpa %s10, 0
    %12 = vsyncpa [#allocation5], 0
    %s13 = scalar_lea.sflag [#allocation5], 1
    %14 = vsyncpa %s13, 0
    loop: start=0, step=1, limit=4
    $region2: #{tpu_custom_call.1} parent=1 // loop_pre_header
      _
    $region3: #{tpu_custom_call.1} parent=1 // loop_header
      %s16 = sphi 0, %s20
      %p17 = scmp.ge.s32.totalorder %s16, 4
      %s23 = sphi 0, %s35
      %s24 = sphi 0, %s31
      %s25 = sphi 0, %s23
      %s26 = sphi 0, %s24
      %s27 = sphi 0, %s25
      %s28 = sphi 0, %s26
      %s40 = sphi 0, %s42
      %s43 = sphi 0, %s40
      %s44 = sphi 0, %s43
      %s60 = sphi 0, %s44
      %s64 = sphi 0, %s64
      %s66 = sphi 0, %s64
      %s67 = sphi 0, %s66
      %s81 = sphi 0, %s67
      %s85 = sphi 0, %s85
      %s87 = sphi 0, %s85
      %s88 = sphi 0, %s87
      %s102 = sphi 0, %s88
      %s110 = sphi 0, %s112
      %s113 = sphi 0, %s110
      %s114 = sphi 0, %s113
      %s130 = sphi 0, %s114
    $region4: #{tpu_custom_call.1} parent=1 // loop_header_branch
      %19 = sbr.rel (%p17) target = $region8
    $region5: #{tpu_custom_call.1} parent=1 // loop_body
      %s21 = ssub.s32 %s16, 1
      %s22 = ssub.s32 %s16, 2
      %s29 = sadd.s32 1, %s24
      %p30 = scmp.ge.s32.totalorder %s29, 1
      %s31 = scalar_select %p30, 0, %s29
      %s32 = sadd.s32 1, %s23
      %s33 = scalar_select %p30, %s32, %s23
      %p34 = scmp.ge.s32.totalorder %s33, 2
      %s35 = scalar_select %p34, 0, %s33
      %s36 = ssub.s32 %s23, %s35
      %s37 = ssub.s32 %s24, %s31
      %s38 = sor.u32 %s36, %s37
      %p39 = scmp.eq.s32.totalorder %s38, 0
      %s41 = sadd.s32 %s40, 1
      %s42 = scalar_select %p39, %s40, %s41
      %p45 = pneg %p39
      %p46 = scmp.eq.s32.totalorder %s16, 1
      %p47 = por %p45, %p46
      %p48 = scmp.ne.s32.totalorder %s40, %s43
      %p49 = scmp.eq.s32.totalorder %s16, 0
      %p50 = por %p48, %p49
      %p51 = scmp.ne.s32.totalorder %s40, %s43
      %p52 = scmp.eq.s32.totalorder %s21, 1
      %p53 = por %p51, %p52
      %p54 = scmp.ne.s32.totalorder %s43, %s44
      %p55 = scmp.eq.s32.totalorder %s21, 0
      %p56 = por %p54, %p55
      %p57 = scmp.ne.s32.totalorder %s43, %s44
      %p58 = scmp.eq.s32.totalorder %s22, 1
      %p59 = por %p57, %p58
      %p61 = scmp.ne.s32.totalorder %s44, %s60
      %p62 = scmp.eq.s32.totalorder %s22, 0
      %p63 = por %p61, %p62
      %s65 = sadd.s32 %s64, 1
      %p68 = scmp.eq.s32.totalorder %s16, 1
      %p69 = scmp.ne.s32.totalorder %s64, %s66
      %p70 = scmp.eq.s32.totalorder %s16, 0
      %p71 = por %p69, %p70
      %p72 = scmp.ne.s32.totalorder %s64, %s66
      %p73 = scmp.eq.s32.totalorder %s21, 1
      %p74 = por %p72, %p73
      %p75 = scmp.ne.s32.totalorder %s66, %s67
      %p76 = scmp.eq.s32.totalorder %s21, 0
      %p77 = por %p75, %p76
      %p78 = scmp.ne.s32.totalorder %s66, %s67
      %p79 = scmp.eq.s32.totalorder %s22, 1
      %p80 = por %p78, %p79
      %p82 = scmp.ne.s32.totalorder %s67, %s81
      %p83 = scmp.eq.s32.totalorder %s22, 0
      %p84 = por %p82, %p83
      %s86 = sadd.s32 %s85, 1
      %p89 = scmp.eq.s32.totalorder %s16, 1
      %p90 = scmp.ne.s32.totalorder %s85, %s87
      %p91 = scmp.eq.s32.totalorder %s16, 0
      %p92 = por %p90, %p91
      %p93 = scmp.ne.s32.totalorder %s85, %s87
      %p94 = scmp.eq.s32.totalorder %s21, 1
      %p95 = por %p93, %p94
      %p96 = scmp.ne.s32.totalorder %s87, %s88
      %p97 = scmp.eq.s32.totalorder %s21, 0
      %p98 = por %p96, %p97
      %p99 = scmp.ne.s32.totalorder %s87, %s88
      %p100 = scmp.eq.s32.totalorder %s22, 1
      %p101 = por %p99, %p100
      %p103 = scmp.ne.s32.totalorder %s88, %s102
      %p104 = scmp.eq.s32.totalorder %s22, 0
      %p105 = por %p103, %p104
      %s106 = ssub.s32 %s23, %s35
      %s107 = ssub.s32 %s24, %s31
      %s108 = sor.u32 %s106, %s107
      %p109 = scmp.eq.s32.totalorder %s108, 0
      %s111 = sadd.s32 %s110, 1
      %s112 = scalar_select %p109, %s110, %s111
      %p115 = pneg %p109
      %p116 = scmp.eq.s32.totalorder %s16, 1
      %p117 = por %p115, %p116
      %p118 = scmp.ne.s32.totalorder %s110, %s113
      %p119 = scmp.eq.s32.totalorder %s16, 0
      %p120 = por %p118, %p119
      %p121 = scmp.ne.s32.totalorder %s110, %s113
      %p122 = scmp.eq.s32.totalorder %s21, 1
      %p123 = por %p121, %p122
      %p124 = scmp.ne.s32.totalorder %s113, %s114
      %p125 = scmp.eq.s32.totalorder %s21, 0
      %p126 = por %p124, %p125
      %p127 = scmp.ne.s32.totalorder %s113, %s114
      %p128 = scmp.eq.s32.totalorder %s22, 1
      %p129 = por %p127, %p128
      %p131 = scmp.ne.s32.totalorder %s114, %s130
      %p132 = scmp.eq.s32.totalorder %s22, 0
      %p133 = por %p131, %p132
      %p134 = scmp.le.s32.totalorder 1, %s16
      %p135 = scmp.lt.s32.totalorder %s16, 3
      %p136 = pnand %p134, %p135
      %p137 = pneg %p136
      // Predicated region
      $region9: #{tpu_custom_call.1} parent=5 // pred_check
        _
      $region10: #{tpu_custom_call.1} parent=5 // pred_check_branch
        %139 = sbr.rel (%p136) target = $region12
      $region11: #{tpu_custom_call.1} parent=5 // pred_region
        %s140 = ssub.s32 %s16, 1
        // Predicated region
        $region13: #{tpu_custom_call.1} parent=11 // pred_check
          %p141 = pneg %p77
        $region14: #{tpu_custom_call.1} parent=11 // pred_check_branch
          %143 = sbr.rel (%p141) target = $region16
        $region15: #{tpu_custom_call.1} parent=11 // pred_region
          _
        $region16: #{tpu_custom_call.1} parent=11 // pred_fallthru
          _
        // Predicated region
        $region17: #{tpu_custom_call.1} parent=11 // pred_check
          %p144 = pneg %p98
        $region18: #{tpu_custom_call.1} parent=11 // pred_check_branch
          %146 = sbr.rel (%p144) target = $region20
        $region19: #{tpu_custom_call.1} parent=11 // pred_region
          _
        $region20: #{tpu_custom_call.1} parent=11 // pred_fallthru
          _
      $region12: #{tpu_custom_call.1} parent=5 // pred_fallthru
        _
      %p147 = scmp.lt.s32.totalorder %s16, 2
      // Predicated region
      $region21: #{tpu_custom_call.1} parent=5 // pred_check
        %p148 = pneg %p147
      $region22: #{tpu_custom_call.1} parent=5 // pred_check_branch
        %150 = sbr.rel (%p148) target = $region24
      $region23: #{tpu_custom_call.1} parent=5 // pred_region
        // Predicated region
        $region25: #{tpu_custom_call.1} parent=23 // pred_check
          %p151 = pneg %p50
        $region26: #{tpu_custom_call.1} parent=23 // pred_check_branch
          %153 = sbr.rel (%p151) target = $region28
        $region27: #{tpu_custom_call.1} parent=23 // pred_region
          %s154 = sand.u32 %s40, 1
          %s155 = scalar_lea.sflag [#allocation4], %s154
          %s156 = sand.u32 %s40, 1
          %s157 = smul.addr %s156, 128
          %s158 = scalar_lea.vmem [#allocation3], %s157
          %s159 = smul.u32 2, %s24
          %s161 = ssub.s32 2048, 2048
          %162 = vsyncadd %s155, %s161
          %s163 = smul.addr %s23, 16
          %s164 = sadd.s32 %s159, %s163
          %s165 = smul.addr %s164, 128
          %s166 = scalar_lea.hbm %s0, %s165
          %s167 = sshll.u32 %s158, 4
          %s168 = int_to_ptr.vmem [resolvable:$true] %s167
          %173 = dma.hbm_to_vmem [thread:$0]  %s166, 2048, %s168, %s155, 256, 256, 16
        $region28: #{tpu_custom_call.1} parent=23 // pred_fallthru
          _
      $region24: #{tpu_custom_call.1} parent=5 // pred_fallthru
        _
      %p174 = scmp.le.s32.totalorder 1, %s16
      %p175 = scmp.lt.s32.totalorder %s16, 3
      %p176 = pnand %p174, %p175
      %p177 = pneg %p176
      // Predicated region
      $region29: #{tpu_custom_call.1} parent=5 // pred_check
        _
      $region30: #{tpu_custom_call.1} parent=5 // pred_check_branch
        %179 = sbr.rel (%p176) target = $region32
      $region31: #{tpu_custom_call.1} parent=5 // pred_region
        %s180 = ssub.s32 %s16, 1
        %s181 = sand.u32 %s43, 1
        %s182 = scalar_lea.sflag [#allocation4], %s181
        %s183 = sand.u32 %s43, 1
        %s184 = smul.addr %s183, 128
        %s185 = scalar_lea.vmem [#allocation3], %s184
        // Predicated region
        $region33: #{tpu_custom_call.1} parent=31 // pred_check
          %p186 = pneg %p56
        $region34: #{tpu_custom_call.1} parent=31 // pred_check_branch
          %188 = sbr.rel (%p186) target = $region36
        $region35: #{tpu_custom_call.1} parent=31 // pred_region
          %189 = dma.done %s182, 2048
        $region36: #{tpu_custom_call.1} parent=31 // pred_fallthru
          _
        %s190 = sand.u32 %s43, 1
        %s191 = scalar_lea.sflag [#allocation4], %s190
        %s192 = sand.u32 %s43, 1
        %s193 = smul.addr %s192, 128
        %s194 = scalar_lea.vmem [#allocation3], %s193
        %p195 = pneg %p56
        %p196 = pneg %p53
        %p197 = pneg %p77
        %p198 = pneg %p74
        %p199 = pneg %p98
        %p200 = pneg %p95
        %p201 = pneg %p126
        %p202 = pneg %p123
        %s203 = sand.u32 %s113, 1
        %s204 = scalar_lea.sflag [#allocation5], %s203
        %s205 = sand.u32 %s113, 1
        %s206 = smul.addr %s205, 2
        %s207 = scalar_lea.vmem [#allocation6], %s206
        %s208 = smul.u32 2, %s26
        %s209 = smul.u32 2, %s26
        %v210 = vld [vmem:[%s185] sm:$0xff]
        %v211 = vld [vmem:[%s185 + $0x8] sm:$0xff]
        %v212 = vld [vmem:[%s185 + $0x10] sm:$0xff]
        %v213 = vld [vmem:[%s185 + $0x18] sm:$0xff]
        %v214 = vld [vmem:[%s185 + $0x20] sm:$0xff]
        %v215 = vld [vmem:[%s185 + $0x28] sm:$0xff]
        %v216 = vld [vmem:[%s185 + $0x30] sm:$0xff]
        %v217 = vld [vmem:[%s185 + $0x38] sm:$0xff]
        %v218 = vld [vmem:[%s185 + $0x40] sm:$0xff]
        %v219 = vld [vmem:[%s185 + $0x48] sm:$0xff]
        %v220 = vld [vmem:[%s185 + $0x50] sm:$0xff]
        %v221 = vld [vmem:[%s185 + $0x58] sm:$0xff]
        %v222 = vld [vmem:[%s185 + $0x60] sm:$0xff]
        %v223 = vld [vmem:[%s185 + $0x68] sm:$0xff]
        %v224 = vld [vmem:[%s185 + $0x70] sm:$0xff]
        %v225 = vld [vmem:[%s185 + $0x78] sm:$0xff]
        %v226 = vld [vmem:[%s1] sm:$0xff]
        %v227 = vld [vmem:[%s1 + $0x8] sm:$0xff]
        %v228 = vld [vmem:[%s1 + $0x10] sm:$0xff]
        %v229 = vld [vmem:[%s1 + $0x18] sm:$0xff]
        %v230 = vld [vmem:[%s1 + $0x20] sm:$0xff]
        %v231 = vld [vmem:[%s1 + $0x28] sm:$0xff]
        %v232 = vld [vmem:[%s1 + $0x30] sm:$0xff]
        %v233 = vld [vmem:[%s1 + $0x38] sm:$0xff]
        %235 = vset.pattern.permute.xlu0 0
        %236 = vperm.xlu0 %235, %v226
        %v237 = vpop.permute.xlu0 %236
        %240 = vset.pattern.permute.xlu0 0
        %241 = vperm.xlu0 %240, %v227
        %v242 = vpop.permute.xlu0 %241
        %245 = vset.pattern.permute.xlu0 0
        %246 = vperm.xlu0 %245, %v228
        %v247 = vpop.permute.xlu0 %246
        %250 = vset.pattern.permute.xlu0 0
        %251 = vperm.xlu0 %250, %v229
        %v252 = vpop.permute.xlu0 %251
        %255 = vset.pattern.permute.xlu0 0
        %256 = vperm.xlu0 %255, %v230
        %v257 = vpop.permute.xlu0 %256
        %260 = vset.pattern.permute.xlu0 0
        %261 = vperm.xlu0 %260, %v231
        %v262 = vpop.permute.xlu0 %261
        %265 = vset.pattern.permute.xlu0 0
        %266 = vperm.xlu0 %265, %v232
        %v267 = vpop.permute.xlu0 %266
        %270 = vset.pattern.permute.xlu0 0
        %271 = vperm.xlu0 %270, %v233
        %v272 = vpop.permute.xlu0 %271
        %v274 = vmul.f32 %v210, %v237
        %v275 = vmul.f32 %v211, %v237
        %v276 = vmul.f32 %v212, %v242
        %v277 = vmul.f32 %v213, %v242
        %v278 = vmul.f32 %v214, %v247
        %v279 = vmul.f32 %v215, %v247
        %v280 = vmul.f32 %v216, %v252
        %v281 = vmul.f32 %v217, %v252
        %v282 = vmul.f32 %v218, %v257
        %v283 = vmul.f32 %v219, %v257
        %v284 = vmul.f32 %v220, %v262
        %v285 = vmul.f32 %v221, %v262
        %v286 = vmul.f32 %v222, %v267
        %v287 = vmul.f32 %v223, %v267
        %v288 = vmul.f32 %v224, %v272
        %v289 = vmul.f32 %v225, %v272
        %v290 = vadd.f32 %v274, %v276
        %v291 = vadd.f32 %v290, %v278
        %v292 = vadd.f32 %v291, %v280
        %v293 = vadd.f32 %v292, %v282
        %v294 = vadd.f32 %v293, %v284
        %v295 = vadd.f32 %v294, %v286
        %v296 = vadd.f32 %v295, %v288
        %v297 = vrot.slane %v296, 4
        %v298 = vadd.f32 %v296, %v297
        %v299 = vrot.slane %v298, 2
        %v300 = vadd.f32 %v298, %v299
        %v301 = vrot.slane %v300, 1
        %v302 = vadd.f32 %v300, %v301
        %v303 = vadd.f32 %v275, %v277
        %v304 = vadd.f32 %v303, %v279
        %v305 = vadd.f32 %v304, %v281
        %v306 = vadd.f32 %v305, %v283
        %v307 = vadd.f32 %v306, %v285
        %v308 = vadd.f32 %v307, %v287
        %v309 = vadd.f32 %v308, %v289
        %v310 = vrot.slane %v309, 4
        %v311 = vadd.f32 %v309, %v310
        %v312 = vrot.slane %v311, 2
        %v313 = vadd.f32 %v311, %v312
        %v314 = vrot.slane %v313, 1
        %v315 = vadd.f32 %v313, %v314
        %s316 = sld [smem:[#allocation2]]
        %v317 = vstv %s316
        %v318 = vadd.f32 %v302, %v317
        %v319 = vadd.f32 %v315, %v317
        %v322 = vcombine.low %v318, %v319
        %v324 = vunpack.c.l.s4 1966171168
        %v325 = vunpack.c.0.s8 %v324
        %v326 = vlaneseq
        %v327 = vshrl.u32 %v326, 7
        %v328 = vsub.s32 %v325, %v327
        %v329 = vrot.slane %v322, %v328
        %v331 = vunpack.c.l.s4 1966171168
        %v332 = vunpack.c.0.s8 %v331
        %v333 = vlaneseq
        %v334 = vshrl.u32 %v333, 7
        %v335 = vsub.s32 %v332, %v334
        %v336 = vrot.slane %v329, %v335
        %v338 = vlaneseq
        %vm339 = vcmp.ge.s32.totalorder %v338, 0
        %vm340 = vcmp.lt.s32.totalorder %v338, 256
        %vm341 = vmand %vm339, %vm340
        %342 = vst.msk [vmem:[%s207] sm:$0x3] %vm341, %v336
        %s343 = sand.u32 %s113, 1
        %s344 = scalar_lea.sflag [#allocation5], %s343
        %s345 = sand.u32 %s113, 1
        %s346 = smul.addr %s345, 2
        %s347 = scalar_lea.vmem [#allocation6], %s346
        // Predicated region
        $region37: #{tpu_custom_call.1} parent=31 // pred_check
          %p348 = pneg %p123
        $region38: #{tpu_custom_call.1} parent=31 // pred_check_branch
          %350 = sbr.rel (%p348) target = $region40
        $region39: #{tpu_custom_call.1} parent=31 // pred_region
          %s351 = smul.u32 2, %s26
          %s353 = ssub.s32 32, 32
          %354 = vsyncadd %s344, %s353
          %s355 = smul.addr %s25, 2
          %s356 = sadd.s32 %s351, %s355
          %s357 = smul.addr %s356, 16
          %s358 = scalar_lea.hbm %s3, %s357
          %s360 = sshll.u32 %s347, 4
          %s361 = int_to_ptr.vmem [resolvable:$true] %s360
          %363 = dma.vmem_to_hbm [thread:$0]  %s361, 32, %s358, %s344
        $region40: #{tpu_custom_call.1} parent=31 // pred_fallthru
          _
      $region32: #{tpu_custom_call.1} parent=5 // pred_fallthru
        _
      %p364 = scmp.le.s32.totalorder 2, %s16
      // Predicated region
      $region41: #{tpu_custom_call.1} parent=5 // pred_check
        %p365 = pneg %p364
      $region42: #{tpu_custom_call.1} parent=5 // pred_check_branch
        %367 = sbr.rel (%p365) target = $region44
      $region43: #{tpu_custom_call.1} parent=5 // pred_region
        %s368 = ssub.s32 %s16, 2
        // Predicated region
        $region45: #{tpu_custom_call.1} parent=43 // pred_check
          %p369 = pneg %p129
        $region46: #{tpu_custom_call.1} parent=43 // pred_check_branch
          %371 = sbr.rel (%p369) target = $region48
        $region47: #{tpu_custom_call.1} parent=43 // pred_region
          %s372 = sand.u32 %s114, 1
          %s373 = scalar_lea.sflag [#allocation5], %s372
          %s374 = sand.u32 %s114, 1
          %s375 = smul.addr %s374, 2
          %s376 = scalar_lea.vmem [#allocation6], %s375
          %377 = dma.done %s373, 32
        $region48: #{tpu_custom_call.1} parent=43 // pred_fallthru
          _
      $region44: #{tpu_custom_call.1} parent=5 // pred_fallthru
        _
    $region6: #{tpu_custom_call.1} parent=1 // loop_footer
      %s20 = sadd.s32 1, %s16
    $region7: #{tpu_custom_call.1} parent=1 // loop_footer_branch
      %15 = sbr.rel target = $region3
    $region8: #{tpu_custom_call.1} parent=1 // loop_exit
      _
    %378 = vsyncpa [#allocation4], 1
    %s379 = scalar_lea.sflag [#allocation4], 1
    %380 = vsyncpa %s379, 1
    %381 = vsyncpa [#allocation5], 1
    %s382 = scalar_lea.sflag [#allocation5], 1
    %383 = vsyncpa %s382, 1

</llo_original>
